<compile_context>
chip_gen: v7x
topology: tpu7x:2x2x1
jax: 0.10.0
libtpu: 0.0.40
codegen_flags: <defaults>
</compile_context>

<pallas_src>
import jax
import jax.numpy as jnp
from jax.experimental import pallas as pl
from jax.experimental.pallas import tpu as pltpu


def _matmul_bias_relu_kernel(p_ref, w_ref, b_ref, o_ref):
    # p_ref: (m_tile, Kp)   im2col patches (rows = output pixels)
    # w_ref: (Kp, Cout)     flattened filter bank (resident: constant index_map)
    # b_ref: (1, Cout)      bias (f32, resident)
    # o_ref: (m_tile, Cout) lane-dense output slab (unmasked vst)
    acc = jnp.dot(p_ref[...], w_ref[...],
                  preferred_element_type=jnp.float32)        # one MXU pass
    out = acc + b_ref[...].astype(jnp.float32)               # bias broadcast
    o_ref[...] = jnp.maximum(out, 0.0).astype(o_ref.dtype)   # ReLU on VPU


def _round_up(x, m):
    return ((x + m - 1) // m) * m


def _num_tensorcores_per_chip():
    """Best-effort core count; only used to decide whether splitting the grid
    buys real parallelism (v7x: 2 TC/chip) or is pure serial-loop overhead."""
    try:
        info = pltpu.get_tpu_info()
        for attr in ("num_tensorcores", "tensorcores_per_chip", "num_cores",
                     "core_count"):
            v = getattr(info, attr, None)
            if isinstance(v, int) and v > 0:
                return v
    except Exception:
        pass
    try:
        kind = jax.devices()[0].device_kind.lower()
        if "v7" in kind:
            return 2
    except Exception:
        pass
    return 1


def conv_relu_pallas(x_nchw, weight_oihw, bias, *, m_tile_max=2048,
                     compute_dtype=jnp.float32, out_dtype=None,
                     out_layout="NCHW"):
    """F.relu(conv2d(x, weight, bias, stride=1, padding=0)) via Pallas.

    out_layout="NHWC" skips the final transpose (biggest end-to-end win when
    the consumer can take channels-last); "NCHW" matches the PyTorch module.
    """
    N, Cin, H, W = x_nchw.shape
    Cout, Cin_w, K, K2 = weight_oihw.shape
    assert Cin == Cin_w and K == K2
    Ho, Wo = H - K + 1, W - K + 1
    M = N * Ho * Wo
    Kc = K * K * Cin
    if out_dtype is None:
        out_dtype = x_nchw.dtype

    # ---- glue: im2col (NCHW -> NHWC -> (M, K*K*Cin)) ----------------------
    # NOTE: for large N*H*W this materializes ~ (Kc/Cin)x the input bytes in
    # HBM; the fused variant (grid over (n, Ho-row blocks) with a (K-1)-row
    # halo brought in via pl.Element / manual DMA, 9-tap concat built in VMEM)
    # removes that traffic. Not worth it at these toy shapes.
    x_nhwc = jnp.transpose(x_nchw, (0, 2, 3, 1))                 # (N, H, W, Cin)
    patches = jnp.concatenate(
        [x_nhwc[:, kh:kh + Ho, kw:kw + Wo, :]
         for kh in range(K) for kw in range(K)], axis=-1)        # (N,Ho,Wo,Kc)
    patches = patches.reshape(M, Kc)

    # weights: (Cout, Cin, K, K) -> (K, K, Cin, Cout) -> (Kc, Cout)
    # (row ordering matches the [kh, kw, cin] concat order of `patches`)
    w_mat = jnp.transpose(weight_oihw, (2, 3, 1, 0)).reshape(Kc, Cout)
    b2d = bias.reshape(1, Cout).astype(jnp.float32)

    # ---- tiling: size m_tile from M, aligned to 256 ------------------------
    ALIGN = 256                       # v6e/v7x MXU M-pass; covers bf16 packing
    Kp = _round_up(Kc, 8)             # 27 -> 32 (full-extent last dim of block)

    n_cores = _num_tensorcores_per_chip()
    max_tile = _round_up(min(m_tile_max, max(M, 1)), ALIGN)
    n_steps = pl.cdiv(M, max_tile)
    if n_cores > 1:
        # only split for real parallelism; keep step count a multiple of the
        # core count so no TensorCore idles on the tail step.
        n_steps = max(n_steps, n_cores)
        n_steps = _round_up(n_steps, n_cores)
    m_tile = _round_up(pl.cdiv(M, n_steps), ALIGN)
    Mp = n_steps * m_tile

    patches = jnp.pad(patches, ((0, Mp - M), (0, Kp - Kc))).astype(compute_dtype)
    w_mat = jnp.pad(w_mat, ((0, Kp - Kc), (0, 0))).astype(compute_dtype)

    # ---- VMEM budget / cost hints ------------------------------------------
    in_b = jnp.dtype(compute_dtype).itemsize
    out_b = jnp.dtype(out_dtype).itemsize
    vmem_bytes = (2 * m_tile * Kp * in_b            # double-buffered patches
                  + 2 * m_tile * Cout * out_b       # double-buffered output
                  + 2 * (Kp * Cout * in_b + Cout * 4))
    vmem_limit = None
    if vmem_bytes > 24 * 1024 * 1024:
        vmem_limit = min(64 * 1024 * 1024, int(vmem_bytes * 1.25))

    cost = pl.CostEstimate(
        flops=2 * M * Kc * Cout,
        transcendentals=0,
        bytes_accessed=(Mp * Kp * in_b + Kp * Cout * in_b + Cout * 4
                        + Mp * Cout * out_b),
    )

    # ---- one matmul kernel, tiled along the flattened batch*spatial axis ---
    out_flat = pl.pallas_call(
        _matmul_bias_relu_kernel,
        out_shape=jax.ShapeDtypeStruct((Mp, Cout), out_dtype),
        grid_spec=pltpu.PrefetchScalarGridSpec(
            num_scalar_prefetch=0,
            grid=(n_steps,),
            in_specs=[
                pl.BlockSpec((m_tile, Kp), lambda i: (i, 0)),
                pl.BlockSpec((Kp, Cout), lambda i: (0, 0)),   # resident weights
                pl.BlockSpec((1, Cout), lambda i: (0, 0)),    # resident bias
            ],
            out_specs=pl.BlockSpec((m_tile, Cout), lambda i: (i, 0)),
        ),
        compiler_params=pltpu.CompilerParams(
            dimension_semantics=("parallel",),
            vmem_limit_bytes=vmem_limit),
        cost_estimate=cost,
    )(patches, w_mat, b2d)

    out_nhwc = out_flat[:M].reshape(N, Ho, Wo, Cout)
    if out_layout == "NHWC":
        return out_nhwc                                   # no extra HBM pass
    # PyTorch module convention (costs one extra read+write of the output).
    return jnp.transpose(out_nhwc, (0, 3, 1, 2))          # (N, Cout, Ho, Wo)


if __name__ == "__main__":
    # module defaults: in_channels=3, out_channels=256, kernel_size=3, stride=1
    N, Cin, H, W = 2, 3, 16, 16
    Cout, K = 256, 3

    key = jax.random.PRNGKey(0)
    kx, kw, kb = jax.random.split(key, 3)

    x = jax.random.normal(kx, (N, Cin, H, W), dtype=jnp.float32)

    # deterministic parameter init mimicking nn.Conv2d (uniform +/- 1/sqrt(fan_in))
    fan_in = Cin * K * K
    bound = 1.0 / jnp.sqrt(jnp.float32(fan_in))
    weight = jax.random.uniform(kw, (Cout, Cin, K, K),
                                minval=-bound, maxval=bound, dtype=jnp.float32)
    bias = jax.random.uniform(kb, (Cout,),
                              minval=-bound, maxval=bound, dtype=jnp.float32)

    # pure-JAX reference (same semantics as F.relu(nn.Conv2d(...)(x)))
    ref = jax.lax.conv_general_dilated(
        x, weight, window_strides=(1, 1), padding="VALID",
        dimension_numbers=("NCHW", "OIHW", "NCHW"))
    ref = jnp.maximum(ref + bias.reshape(1, Cout, 1, 1), 0.0)

    # --- f32 path: exact module semantics (NCHW output) ---------------------
    out = jax.block_until_ready(conv_relu_pallas(x, weight, bias))
    assert out.shape == (N, Cout, H - K + 1, W - K + 1)
    assert jnp.allclose(out, ref, atol=1e-4, rtol=1e-4)

    # --- NHWC fast path (transpose skipped) ----------------------------------
    out_nhwc = jax.block_until_ready(
        conv_relu_pallas(x, weight, bias, out_layout="NHWC"))
    assert out_nhwc.shape == (N, H - K + 1, W - K + 1, Cout)
    assert jnp.allclose(jnp.transpose(out_nhwc, (0, 3, 1, 2)), ref,
                        atol=1e-4, rtol=1e-4)

    # --- bf16-operand path (v6e/v7x MXU rate, f32 accumulation) --------------
    # compare against a reference computed on bf16-rounded operands so the
    # check isolates summation-order differences only.
    xb = x.astype(jnp.bfloat16).astype(jnp.float32)
    wb = weight.astype(jnp.bfloat16).astype(jnp.float32)
    ref_bf16 = jax.lax.conv_general_dilated(
        xb, wb, window_strides=(1, 1), padding="VALID",
        dimension_numbers=("NCHW", "OIHW", "NCHW"))
    ref_bf16 = jnp.maximum(ref_bf16 + bias.reshape(1, Cout, 1, 1), 0.0)
    out_bf16 = jax.block_until_ready(
        conv_relu_pallas(x, weight, bias, compute_dtype=jnp.bfloat16))
    assert jnp.allclose(out_bf16, ref_bf16, atol=1e-4, rtol=1e-4)

    # --- bf16 output store (halves dominant HBM output stream) ---------------
    out_bf16o = jax.block_until_ready(
        conv_relu_pallas(x, weight, bias, compute_dtype=jnp.bfloat16,
                         out_dtype=jnp.bfloat16, out_layout="NHWC"))
    assert out_bf16o.dtype == jnp.bfloat16
    assert jnp.allclose(
        jnp.transpose(out_bf16o.astype(jnp.float32), (0, 3, 1, 2)),
        ref_bf16, atol=2e-2, rtol=2e-2)

    print("KERNEL_OK")
</pallas_src>

<mosaic_0001>
module attributes {stable_mosaic.version = 11 : i64} {
  func.func @_matmul_bias_relu_kernel(%arg0: i32, %arg1: memref<512x32xf32, #tpu.memory_space<vmem>>, %arg2: memref<32x256xf32, #tpu.memory_space<vmem>>, %arg3: memref<1x256xf32, #tpu.memory_space<vmem>>, %arg4: memref<512x256xf32, #tpu.memory_space<vmem>>) attributes {dimension_semantics = [#tpu.dimension_semantics<parallel>], iteration_bounds = array<i64: 1>, scalar_prefetch = 0 : i64, scratch_operands = 0 : i64, tpu.core_type = #tpu.core_type<tc>, window_params = [{transform_indices = @transform_0, window_bounds = array<i64: 512, 32>}, {pipeline_mode = #tpu.pipeline_mode<synchronous>, transform_indices = @transform_1, window_bounds = array<i64: 32, 256>}, {pipeline_mode = #tpu.pipeline_mode<synchronous>, transform_indices = @transform_2, window_bounds = array<i64: 1, 256>}, {transform_indices = @transform_3, window_bounds = array<i64: 512, 256>}]} {
    %c0 = arith.constant 0 : index
    %c0_0 = arith.constant 0 : index
    %0 = vector.load %arg1[%c0, %c0_0] : memref<512x32xf32, #tpu.memory_space<vmem>>, vector<512x32xf32>
    %c0_1 = arith.constant 0 : index
    %c0_2 = arith.constant 0 : index
    %1 = vector.load %arg2[%c0_1, %c0_2] : memref<32x256xf32, #tpu.memory_space<vmem>>, vector<32x256xf32>
    %cst = arith.constant dense<0.000000e+00> : vector<512x256xf32>
    %2 = tpu.matmul %0, %1, %cst {dimension_numbers = #tpu.dot_dimension_numbers<[1], [0], [0], [1], [0, 0, 1, 1], [], []>} : vector<512x32xf32>, vector<32x256xf32>, vector<512x256xf32> -> vector<512x256xf32>
    %c0_3 = arith.constant 0 : index
    %c0_4 = arith.constant 0 : index
    %3 = vector.load %arg3[%c0_3, %c0_4] : memref<1x256xf32, #tpu.memory_space<vmem>>, vector<1x256xf32>
    %4 = vector.broadcast %3 : vector<1x256xf32> to vector<512x256xf32>
    %5 = arith.addf %2, %4 : vector<512x256xf32>
    %cst_5 = arith.constant 0.000000e+00 : f32
    %6 = vector.broadcast %cst_5 : f32 to vector<512x256xf32>
    %7 = arith.maximumf %5, %6 : vector<512x256xf32>
    %c0_6 = arith.constant 0 : index
    %c0_7 = arith.constant 0 : index
    %8 = vector.load %arg4[%c0_6, %c0_7] : memref<512x256xf32, #tpu.memory_space<vmem>>, vector<512x256xf32>
    tpu.vector_store %arg4[%c0_6, %c0_7], %7 {strides = array<i32>} : memref<512x256xf32, #tpu.memory_space<vmem>>, vector<512x256xf32>,
    return
  }
  func.func @transform_0(%arg0: i32) -> (i32, i32) {
    %c0_i32 = arith.constant 0 : i32
    %c0_i32_0 = arith.constant 0 : i32
    return %arg0, %c0_i32 : i32, i32
  }
  func.func @transform_1(%arg0: i32) -> (i32, i32) {
    %c0_i32 = arith.constant 0 : i32
    %c0_i32_0 = arith.constant 0 : i32
    %c0_i32_1 = arith.constant 0 : i32
    return %c0_i32, %c0_i32_0 : i32, i32
  }
  func.func @transform_2(%arg0: i32) -> (i32, i32) {
    %c0_i32 = arith.constant 0 : i32
    %c0_i32_0 = arith.constant 0 : i32
    %c0_i32_1 = arith.constant 0 : i32
    return %c0_i32, %c0_i32_0 : i32, i32
  }
  func.func @transform_3(%arg0: i32) -> (i32, i32) {
    %c0_i32 = arith.constant 0 : i32
    %c0_i32_0 = arith.constant 0 : i32
    return %arg0, %c0_i32 : i32, i32
  }
}

</mosaic_0001>

<llo_original>
// kernel: tpu_custom_call.1
$region0: #{tpu_custom_call.1}
  #allocation0 [shape = 'u32[]', space=smem, size = 0x4, offset = 0x4, fixed_abs, tag = 'smem constant byte address 0x4 - core index']
  #allocation1 [shape = 'u32[144,128]{1,0:T(1,128)}', space=vmem, size = 0x12000, scoped, tag = 'internal scratch']
  %s0 = inlined_call_operand.vmem [shape: f32[512,32], index: 0, kind: input, shape index: {}]
  %s1 = inlined_call_operand.vmem [shape: f32[32,256], index: 1, kind: input, shape index: {}]
  %s2 = inlined_call_operand.vmem [shape: f32[1,256], index: 2, kind: input, shape index: {}]
  %s3 = inlined_call_operand.hbm [shape: f32[512,256], index: 3, kind: output, shape index: {}]
  %s4 = sld [smem:[#allocation0]]
  $region22: #{tpu_custom_call.1} parent=0
    _
  %s6 = ssub.s32 1, %s4
  %s7 = scalar_select 0, %s6, %s4
  $region1: #{tpu_custom_call.1} parent=0
    #allocation2 [shape = 'u8[524288]{0}', space=vmem, size = 0x80000, scoped, tag = 'output window, operand 0, single buffered']
    #allocation3 [shape = 's32[1]{0}', space=sflag, size = 0x4, scoped, tag = 'scoped memory for tpu_custom_call.1']
    %8 = vsyncpa [#allocation3], 0
    // Predicated region
    $region2: #{tpu_custom_call.1} parent=1 // pred_check
      _
    $region3: #{tpu_custom_call.1} parent=1 // pred_check_branch
      %10 = sbr.rel (0) target = $region5
    $region4: #{tpu_custom_call.1} parent=1 // pred_region
      _
    $region5: #{tpu_custom_call.1} parent=1 // pred_fallthru
      _
    // Predicated region
    $region6: #{tpu_custom_call.1} parent=1 // pred_check
      _
    $region7: #{tpu_custom_call.1} parent=1 // pred_check_branch
      %12 = sbr.rel (0) target = $region9
    $region8: #{tpu_custom_call.1} parent=1 // pred_region
      _
    $region9: #{tpu_custom_call.1} parent=1 // pred_fallthru
      _
    // Predicated region
    $region10: #{tpu_custom_call.1} parent=1 // pred_check
      _
    $region11: #{tpu_custom_call.1} parent=1 // pred_check_branch
      %14 = sbr.rel (0) target = $region13
    $region12: #{tpu_custom_call.1} parent=1 // pred_region
      _
    $region13: #{tpu_custom_call.1} parent=1 // pred_fallthru
      _
    %v15 = vld [vmem:[%s0] sm:$0xff]
    %v16 = vld [vmem:[%s0 + $0x8] sm:$0xff]
    %v17 = vld [vmem:[%s0 + $0x10] sm:$0xff]
    %v18 = vld [vmem:[%s0 + $0x18] sm:$0xff]
    %v19 = vld [vmem:[%s0 + $0x20] sm:$0xff]
    %v20 = vld [vmem:[%s0 + $0x28] sm:$0xff]
    %v21 = vld [vmem:[%s0 + $0x30] sm:$0xff]
    %v22 = vld [vmem:[%s0 + $0x38] sm:$0xff]
    %v23 = vld [vmem:[%s0 + $0x40] sm:$0xff]
    %v24 = vld [vmem:[%s0 + $0x48] sm:$0xff]
    %v25 = vld [vmem:[%s0 + $0x50] sm:$0xff]
    %v26 = vld [vmem:[%s0 + $0x58] sm:$0xff]
    %v27 = vld [vmem:[%s0 + $0x60] sm:$0xff]
    %v28 = vld [vmem:[%s0 + $0x68] sm:$0xff]
    %v29 = vld [vmem:[%s0 + $0x70] sm:$0xff]
    %v30 = vld [vmem:[%s0 + $0x78] sm:$0xff]
    %v31 = vld [vmem:[%s0 + $0x80] sm:$0xff]
    %v32 = vld [vmem:[%s0 + $0x88] sm:$0xff]
    %v33 = vld [vmem:[%s0 + $0x90] sm:$0xff]
    %v34 = vld [vmem:[%s0 + $0x98] sm:$0xff]
    %v35 = vld [vmem:[%s0 + $0xa0] sm:$0xff]
    %v36 = vld [vmem:[%s0 + $0xa8] sm:$0xff]
    %v37 = vld [vmem:[%s0 + $0xb0] sm:$0xff]
    %v38 = vld [vmem:[%s0 + $0xb8] sm:$0xff]
    %v39 = vld [vmem:[%s0 + $0xc0] sm:$0xff]
    %v40 = vld [vmem:[%s0 + $0xc8] sm:$0xff]
    %v41 = vld [vmem:[%s0 + $0xd0] sm:$0xff]
    %v42 = vld [vmem:[%s0 + $0xd8] sm:$0xff]
    %v43 = vld [vmem:[%s0 + $0xe0] sm:$0xff]
    %v44 = vld [vmem:[%s0 + $0xe8] sm:$0xff]
    %v45 = vld [vmem:[%s0 + $0xf0] sm:$0xff]
    %v46 = vld [vmem:[%s0 + $0xf8] sm:$0xff]
    %v47 = vld [vmem:[%s0 + $0x100] sm:$0xff]
    %v48 = vld [vmem:[%s0 + $0x108] sm:$0xff]
    %v49 = vld [vmem:[%s0 + $0x110] sm:$0xff]
    %v50 = vld [vmem:[%s0 + $0x118] sm:$0xff]
    %v51 = vld [vmem:[%s0 + $0x120] sm:$0xff]
    %v52 = vld [vmem:[%s0 + $0x128] sm:$0xff]
    %v53 = vld [vmem:[%s0 + $0x130] sm:$0xff]
    %v54 = vld [vmem:[%s0 + $0x138] sm:$0xff]
    %v55 = vld [vmem:[%s0 + $0x140] sm:$0xff]
    %v56 = vld [vmem:[%s0 + $0x148] sm:$0xff]
    %v57 = vld [vmem:[%s0 + $0x150] sm:$0xff]
    %v58 = vld [vmem:[%s0 + $0x158] sm:$0xff]
    %v59 = vld [vmem:[%s0 + $0x160] sm:$0xff]
    %v60 = vld [vmem:[%s0 + $0x168] sm:$0xff]
    %v61 = vld [vmem:[%s0 + $0x170] sm:$0xff]
    %v62 = vld [vmem:[%s0 + $0x178] sm:$0xff]
    %v63 = vld [vmem:[%s0 + $0x180] sm:$0xff]
    %v64 = vld [vmem:[%s0 + $0x188] sm:$0xff]
    %v65 = vld [vmem:[%s0 + $0x190] sm:$0xff]
    %v66 = vld [vmem:[%s0 + $0x198] sm:$0xff]
    %v67 = vld [vmem:[%s0 + $0x1a0] sm:$0xff]
    %v68 = vld [vmem:[%s0 + $0x1a8] sm:$0xff]
    %v69 = vld [vmem:[%s0 + $0x1b0] sm:$0xff]
    %v70 = vld [vmem:[%s0 + $0x1b8] sm:$0xff]
    %v71 = vld [vmem:[%s0 + $0x1c0] sm:$0xff]
    %v72 = vld [vmem:[%s0 + $0x1c8] sm:$0xff]
    %v73 = vld [vmem:[%s0 + $0x1d0] sm:$0xff]
    %v74 = vld [vmem:[%s0 + $0x1d8] sm:$0xff]
    %v75 = vld [vmem:[%s0 + $0x1e0] sm:$0xff]
    %v76 = vld [vmem:[%s0 + $0x1e8] sm:$0xff]
    %v77 = vld [vmem:[%s0 + $0x1f0] sm:$0xff]
    %v78 = vld [vmem:[%s0 + $0x1f8] sm:$0xff]
    %v79 = vld [vmem:[%s1] sm:$0xff]
    %v80 = vld [vmem:[%s1 + $0x8] sm:$0xff]
    %v81 = vld [vmem:[%s1 + $0x10] sm:$0xff]
    %v82 = vld [vmem:[%s1 + $0x18] sm:$0xff]
    %v83 = vld [vmem:[%s1 + $0x20] sm:$0xff]
    %v84 = vld [vmem:[%s1 + $0x28] sm:$0xff]
    %v85 = vld [vmem:[%s1 + $0x30] sm:$0xff]
    %v86 = vld [vmem:[%s1 + $0x38] sm:$0xff]
    %v87 = vld [vmem:[%s2] sm:$0x3]
    %v89 = vlaneseq
    %v90 = vshrl.u32 %v89, 7
    %v91 = vsub.s32 0, %v90
    %v92 = vrot.slane %v87, %v91
    %v93 = vlaneseq
    %v94 = vshrl.u32 %v93, 7
    %v95 = vsub.s32 1, %v94
    %v96 = vrot.slane %v87, %v95
    %vm99 = vcmask 261120
    %v101 = vsel %vm99, %v15, 0
    %v104 = vsel %vm99, %v16, 0
    %v107 = vsel %vm99, %v17, 0
    %v110 = vsel %vm99, %v18, 0
    %v113 = vsel %vm99, %v19, 0
    %v116 = vsel %vm99, %v20, 0
    %v119 = vsel %vm99, %v21, 0
    %v122 = vsel %vm99, %v22, 0
    %v125 = vsel %vm99, %v23, 0
    %v128 = vsel %vm99, %v24, 0
    %v131 = vsel %vm99, %v25, 0
    %v134 = vsel %vm99, %v26, 0
    %v137 = vsel %vm99, %v27, 0
    %v140 = vsel %vm99, %v28, 0
    %v143 = vsel %vm99, %v29, 0
    %v146 = vsel %vm99, %v30, 0
    %v149 = vsel %vm99, %v31, 0
    %v152 = vsel %vm99, %v32, 0
    %v155 = vsel %vm99, %v33, 0
    %v158 = vsel %vm99, %v34, 0
    %v161 = vsel %vm99, %v35, 0
    %v164 = vsel %vm99, %v36, 0
    %v167 = vsel %vm99, %v37, 0
    %v170 = vsel %vm99, %v38, 0
    %v173 = vsel %vm99, %v39, 0
    %v176 = vsel %vm99, %v40, 0
    %v179 = vsel %vm99, %v41, 0
    %v182 = vsel %vm99, %v42, 0
    %v185 = vsel %vm99, %v43, 0
    %v188 = vsel %vm99, %v44, 0
    %v191 = vsel %vm99, %v45, 0
    %v194 = vsel %vm99, %v46, 0
    %v197 = vsel %vm99, %v47, 0
    %v200 = vsel %vm99, %v48, 0
    %v203 = vsel %vm99, %v49, 0
    %v206 = vsel %vm99, %v50, 0
    %v209 = vsel %vm99, %v51, 0
    %v212 = vsel %vm99, %v52, 0
    %v215 = vsel %vm99, %v53, 0
    %v218 = vsel %vm99, %v54, 0
    %v221 = vsel %vm99, %v55, 0
    %v224 = vsel %vm99, %v56, 0
    %v227 = vsel %vm99, %v57, 0
    %v230 = vsel %vm99, %v58, 0
    %v233 = vsel %vm99, %v59, 0
    %v236 = vsel %vm99, %v60, 0
    %v239 = vsel %vm99, %v61, 0
    %v242 = vsel %vm99, %v62, 0
    %v245 = vsel %vm99, %v63, 0
    %v248 = vsel %vm99, %v64, 0
    %v251 = vsel %vm99, %v65, 0
    %v254 = vsel %vm99, %v66, 0
    %v257 = vsel %vm99, %v67, 0
    %v260 = vsel %vm99, %v68, 0
    %v263 = vsel %vm99, %v69, 0
    %v266 = vsel %vm99, %v70, 0
    %v269 = vsel %vm99, %v71, 0
    %v272 = vsel %vm99, %v72, 0
    %v275 = vsel %vm99, %v73, 0
    %v278 = vsel %vm99, %v74, 0
    %v281 = vsel %vm99, %v75, 0
    %v284 = vsel %vm99, %v76, 0
    %v287 = vsel %vm99, %v77, 0
    %v290 = vsel %vm99, %v78, 0
    %292 = vmatprep.subr.mxu0 %v80
    %293 = vmatpush1.msra.mxu0 %v79
    %294 = vmatprep.subr.mxu0 %v82
    %295 = vmatpush1.msra.mxu0 %v81
    %296 = vmatprep.subr.mxu0 %v84
    %297 = vmatpush1.msra.mxu0 %v83
    %298 = vmatprep.subr.mxu0 %v86
    %299 = vmatpush1.msra.mxu0 %v85
    %300 = vmatprep.subr.mxu0 0.0
    %301 = vmatpush1.msra.mxu0 0.0
    %302 = vmatprep.subr.mxu0 0.0
    %303 = vmatpush1.msra.mxu0 0.0
    %304 = vmatprep.subr.mxu0 0.0
    %305 = vmatpush1.msra.mxu0 0.0
    %306 = vmatprep.subr.mxu0 0.0
    %307 = vmatpush1.msra.mxu0 0.0
    %308 = vmatprep.subr.mxu0 0.0
    %309 = vmatpush1.msra.mxu0 0.0
    %310 = vmatprep.subr.mxu0 0.0
    %311 = vmatpush1.msra.mxu0 0.0
    %312 = vmatprep.subr.mxu0 0.0
    %313 = vmatpush1.msra.mxu0 0.0
    %314 = vmatprep.subr.mxu0 0.0
    %315 = vmatpush1.msra.mxu0 0.0
    %316 = vmatprep.subr.mxu0 0.0
    %317 = vmatpush1.msra.mxu0 0.0
    %318 = vmatprep.subr.mxu0 0.0
    %319 = vmatpush1.msra.mxu0 0.0
    %320 = vmatprep.subr.mxu0 0.0
    %321 = vmatpush1.msra.mxu0 0.0
    %322 = vmatprep.subr.mxu0 0.0
    %323 = vmatpush1.msra.mxu0 0.0
    %324 = vmatprep.subr.mxu0 0.0
    %325 = vmatpush1.msra.mxu0 0.0
    %326 = vmatprep.subr.mxu0 0.0
    %327 = vmatpush1.msra.mxu0 0.0
    %328 = vmatprep.subr.mxu0 0.0
    %329 = vmatpush1.msra.mxu0 0.0
    %330 = vmatprep.subr.mxu0 0.0
    %331 = vmatpush1.msra.mxu0 0.0
    %332 = vmatprep.subr.mxu0 0.0
    %333 = vmatpush1.msra.mxu0 0.0
    %334 = vmatprep.subr.mxu0 0.0
    %335 = vmatpush1.msra.mxu0 0.0
    %336 = vmatprep.subr.mxu0 0.0
    %337 = vmatpush1.msra.mxu0 0.0
    %338 = vmatprep.subr.mxu0 0.0
    %339 = vmatpush1.msra.mxu0 0.0
    %340 = vmatprep.subr.mxu0 0.0
    %341 = vmatpush1.msra.mxu0 0.0
    %342 = vmatprep.subr.mxu0 0.0
    %343 = vmatpush1.msra.mxu0 0.0
    %344 = vmatprep.subr.mxu0 0.0
    %345 = vmatpush1.msra.mxu0 0.0
    %346 = vmatprep.subr.mxu0 0.0
    %347 = vmatpush1.msra.mxu0 0.0
    %348 = vmatprep.subr.mxu0 0.0
    %349 = vmatpush1.msra.mxu0 0.0
    %350 = vmatprep.subr.mxu0 0.0
    %351 = vmatpush1.msra.mxu0 0.0
    %352 = vmatprep.subr.mxu0 0.0
    %353 = vmatpush1.msra.mxu0 0.0
    %354 = vmatprep.subr.mxu0 0.0
    %355 = vmatpush1.msra.mxu0 0.0
    %356 = vmatprep.mubr.f32.mxu0 0.0
    %357 = vmatmul.mubr.f32.gmra.mrb[0].mxu0 %v101
    %v358 = vpop.f32.mrb[0].mxu0
    %v359 = vadd.f32 %v92, %v358
    %v360 = vpop.f32.mrb[0].mxu0
    %v361 = vadd.f32 %v96, %v360
    %362 = vmatprep.mubr.f32.mxu0 0.0
    %363 = vmatmul.mubr.f32.gmra.mrb[0].mxu0 %v104
    %v364 = vpop.f32.mrb[0].mxu0
    %v365 = vadd.f32 %v92, %v364
    %v366 = vpop.f32.mrb[0].mxu0
    %v367 = vadd.f32 %v96, %v366
    %368 = vmatprep.mubr.f32.mxu0 0.0
    %369 = vmatmul.mubr.f32.gmra.mrb[0].mxu0 %v107
    %v370 = vpop.f32.mrb[0].mxu0
    %v371 = vadd.f32 %v92, %v370
    %v372 = vpop.f32.mrb[0].mxu0
    %v373 = vadd.f32 %v96, %v372
    %374 = vmatprep.mubr.f32.mxu0 0.0
    %375 = vmatmul.mubr.f32.gmra.mrb[0].mxu0 %v110
    %v376 = vpop.f32.mrb[0].mxu0
    %v377 = vadd.f32 %v92, %v376
    %v378 = vpop.f32.mrb[0].mxu0
    %v379 = vadd.f32 %v96, %v378
    %380 = vmatprep.mubr.f32.mxu0 0.0
    %381 = vmatmul.mubr.f32.gmra.mrb[0].mxu0 %v113
    %v382 = vpop.f32.mrb[0].mxu0
    %v383 = vadd.f32 %v92, %v382
    %v384 = vpop.f32.mrb[0].mxu0
    %v385 = vadd.f32 %v96, %v384
    %386 = vmatprep.mubr.f32.mxu0 0.0
    %387 = vmatmul.mubr.f32.gmra.mrb[0].mxu0 %v116
    %v388 = vpop.f32.mrb[0].mxu0
    %v389 = vadd.f32 %v92, %v388
    %v390 = vpop.f32.mrb[0].mxu0
    %v391 = vadd.f32 %v96, %v390
    %392 = vmatprep.mubr.f32.mxu0 0.0
    %393 = vmatmul.mubr.f32.gmra.mrb[0].mxu0 %v119
    %v394 = vpop.f32.mrb[0].mxu0
    %v395 = vadd.f32 %v92, %v394
    %v396 = vpop.f32.mrb[0].mxu0
    %v397 = vadd.f32 %v96, %v396
    %398 = vmatprep.mubr.f32.mxu0 0.0
    %399 = vmatmul.mubr.f32.gmra.mrb[0].mxu0 %v122
    %v400 = vpop.f32.mrb[0].mxu0
    %v401 = vadd.f32 %v92, %v400
    %v402 = vpop.f32.mrb[0].mxu0
    %v403 = vadd.f32 %v96, %v402
    %404 = vmatprep.mubr.f32.mxu0 0.0
    %405 = vmatmul.mubr.f32.gmra.mrb[0].mxu0 %v125
    %v406 = vpop.f32.mrb[0].mxu0
    %v407 = vadd.f32 %v92, %v406
    %v408 = vpop.f32.mrb[0].mxu0
    %v409 = vadd.f32 %v96, %v408
    %410 = vmatprep.mubr.f32.mxu0 0.0
    %411 = vmatmul.mubr.f32.gmra.mrb[0].mxu0 %v128
    %v412 = vpop.f32.mrb[0].mxu0
    %v413 = vadd.f32 %v92, %v412
    %v414 = vpop.f32.mrb[0].mxu0
    %v415 = vadd.f32 %v96, %v414
    %416 = vmatprep.mubr.f32.mxu0 0.0
    %417 = vmatmul.mubr.f32.gmra.mrb[0].mxu0 %v131
    %v418 = vpop.f32.mrb[0].mxu0
    %v419 = vadd.f32 %v92, %v418
    %v420 = vpop.f32.mrb[0].mxu0
    %v421 = vadd.f32 %v96, %v420
    %422 = vmatprep.mubr.f32.mxu0 0.0
    %423 = vmatmul.mubr.f32.gmra.mrb[0].mxu0 %v134
    %v424 = vpop.f32.mrb[0].mxu0
    %v425 = vadd.f32 %v92, %v424
    %v426 = vpop.f32.mrb[0].mxu0
    %v427 = vadd.f32 %v96, %v426
    %428 = vmatprep.mubr.f32.mxu0 0.0
    %429 = vmatmul.mubr.f32.gmra.mrb[0].mxu0 %v137
    %v430 = vpop.f32.mrb[0].mxu0
    %v431 = vadd.f32 %v92, %v430
    %v432 = vpop.f32.mrb[0].mxu0
    %v433 = vadd.f32 %v96, %v432
    %434 = vmatprep.mubr.f32.mxu0 0.0
    %435 = vmatmul.mubr.f32.gmra.mrb[0].mxu0 %v140
    %v436 = vpop.f32.mrb[0].mxu0
    %v437 = vadd.f32 %v92, %v436
    %v438 = vpop.f32.mrb[0].mxu0
    %v439 = vadd.f32 %v96, %v438
    %440 = vmatprep.mubr.f32.mxu0 0.0
    %441 = vmatmul.mubr.f32.gmra.mrb[0].mxu0 %v143
    %v442 = vpop.f32.mrb[0].mxu0
    %v443 = vadd.f32 %v92, %v442
    %v444 = vpop.f32.mrb[0].mxu0
    %v445 = vadd.f32 %v96, %v444
    %446 = vmatprep.mubr.f32.mxu0 0.0
    %447 = vmatmul.mubr.f32.gmra.mrb[0].mxu0 %v146
    %v448 = vpop.f32.mrb[0].mxu0
    %v449 = vadd.f32 %v92, %v448
    %v450 = vpop.f32.mrb[0].mxu0
    %v451 = vadd.f32 %v96, %v450
    %452 = vmatprep.mubr.f32.mxu0 0.0
    %453 = vmatmul.mubr.f32.gmra.mrb[0].mxu0 %v149
    %v454 = vpop.f32.mrb[0].mxu0
    %v455 = vadd.f32 %v92, %v454
    %v456 = vpop.f32.mrb[0].mxu0
    %v457 = vadd.f32 %v96, %v456
    %458 = vmatprep.mubr.f32.mxu0 0.0
    %459 = vmatmul.mubr.f32.gmra.mrb[0].mxu0 %v152
    %v460 = vpop.f32.mrb[0].mxu0
    %v461 = vadd.f32 %v92, %v460
    %v462 = vpop.f32.mrb[0].mxu0
    %v463 = vadd.f32 %v96, %v462
    %464 = vmatprep.mubr.f32.mxu0 0.0
    %465 = vmatmul.mubr.f32.gmra.mrb[0].mxu0 %v155
    %v466 = vpop.f32.mrb[0].mxu0
    %v467 = vadd.f32 %v92, %v466
    %v468 = vpop.f32.mrb[0].mxu0
    %v469 = vadd.f32 %v96, %v468
    %470 = vmatprep.mubr.f32.mxu0 0.0
    %471 = vmatmul.mubr.f32.gmra.mrb[0].mxu0 %v158
    %v472 = vpop.f32.mrb[0].mxu0
    %v473 = vadd.f32 %v92, %v472
    %v474 = vpop.f32.mrb[0].mxu0
    %v475 = vadd.f32 %v96, %v474
    %476 = vmatprep.mubr.f32.mxu0 0.0
    %477 = vmatmul.mubr.f32.gmra.mrb[0].mxu0 %v161
    %v478 = vpop.f32.mrb[0].mxu0
    %v479 = vadd.f32 %v92, %v478
    %v480 = vpop.f32.mrb[0].mxu0
    %v481 = vadd.f32 %v96, %v480
    %482 = vmatprep.mubr.f32.mxu0 0.0
    %483 = vmatmul.mubr.f32.gmra.mrb[0].mxu0 %v164
    %v484 = vpop.f32.mrb[0].mxu0
    %v485 = vadd.f32 %v92, %v484
    %v486 = vpop.f32.mrb[0].mxu0
    %v487 = vadd.f32 %v96, %v486
    %488 = vmatprep.mubr.f32.mxu0 0.0
    %489 = vmatmul.mubr.f32.gmra.mrb[0].mxu0 %v167
    %v490 = vpop.f32.mrb[0].mxu0
    %v491 = vadd.f32 %v92, %v490
    %v492 = vpop.f32.mrb[0].mxu0
    %v493 = vadd.f32 %v96, %v492
    %494 = vmatprep.mubr.f32.mxu0 0.0
    %495 = vmatmul.mubr.f32.gmra.mrb[0].mxu0 %v170
    %v496 = vpop.f32.mrb[0].mxu0
    %v497 = vadd.f32 %v92, %v496
    %v498 = vpop.f32.mrb[0].mxu0
    %v499 = vadd.f32 %v96, %v498
    %500 = vmatprep.mubr.f32.mxu0 0.0
    %501 = vmatmul.mubr.f32.gmra.mrb[0].mxu0 %v173
    %v502 = vpop.f32.mrb[0].mxu0
    %v503 = vadd.f32 %v92, %v502
    %v504 = vpop.f32.mrb[0].mxu0
    %v505 = vadd.f32 %v96, %v504
    %506 = vmatprep.mubr.f32.mxu0 0.0
    %507 = vmatmul.mubr.f32.gmra.mrb[0].mxu0 %v176
    %v508 = vpop.f32.mrb[0].mxu0
    %v509 = vadd.f32 %v92, %v508
    %v510 = vpop.f32.mrb[0].mxu0
    %v511 = vadd.f32 %v96, %v510
    %512 = vmatprep.mubr.f32.mxu0 0.0
    %513 = vmatmul.mubr.f32.gmra.mrb[0].mxu0 %v179
    %v514 = vpop.f32.mrb[0].mxu0
    %v515 = vadd.f32 %v92, %v514
    %v516 = vpop.f32.mrb[0].mxu0
    %v517 = vadd.f32 %v96, %v516
    %518 = vmatprep.mubr.f32.mxu0 0.0
    %519 = vmatmul.mubr.f32.gmra.mrb[0].mxu0 %v182
    %v520 = vpop.f32.mrb[0].mxu0
    %v521 = vadd.f32 %v92, %v520
    %v522 = vpop.f32.mrb[0].mxu0
    %v523 = vadd.f32 %v96, %v522
    %524 = vmatprep.mubr.f32.mxu0 0.0
    %525 = vmatmul.mubr.f32.gmra.mrb[0].mxu0 %v185
    %v526 = vpop.f32.mrb[0].mxu0
    %v527 = vadd.f32 %v92, %v526
    %v528 = vpop.f32.mrb[0].mxu0
    %v529 = vadd.f32 %v96, %v528
    %530 = vmatprep.mubr.f32.mxu0 0.0
    %531 = vmatmul.mubr.f32.gmra.mrb[0].mxu0 %v188
    %v532 = vpop.f32.mrb[0].mxu0
    %v533 = vadd.f32 %v92, %v532
    %v534 = vpop.f32.mrb[0].mxu0
    %v535 = vadd.f32 %v96, %v534
    %536 = vmatprep.mubr.f32.mxu0 0.0
    %537 = vmatmul.mubr.f32.gmra.mrb[0].mxu0 %v191
    %v538 = vpop.f32.mrb[0].mxu0
    %v539 = vadd.f32 %v92, %v538
    %v540 = vpop.f32.mrb[0].mxu0
    %v541 = vadd.f32 %v96, %v540
    %542 = vmatprep.mubr.f32.mxu0 0.0
    %543 = vmatmul.mubr.f32.gmra.mrb[0].mxu0 %v194
    %v544 = vpop.f32.mrb[0].mxu0
    %v545 = vadd.f32 %v92, %v544
    %v546 = vpop.f32.mrb[0].mxu0
    %v547 = vadd.f32 %v96, %v546
    %548 = vmatprep.mubr.f32.mxu0 0.0
    %549 = vmatmul.mubr.f32.gmra.mrb[0].mxu0 %v197
    %v550 = vpop.f32.mrb[0].mxu0
    %v551 = vadd.f32 %v92, %v550
    %v552 = vpop.f32.mrb[0].mxu0
    %v553 = vadd.f32 %v96, %v552
    %554 = vmatprep.mubr.f32.mxu0 0.0
    %555 = vmatmul.mubr.f32.gmra.mrb[0].mxu0 %v200
    %v556 = vpop.f32.mrb[0].mxu0
    %v557 = vadd.f32 %v92, %v556
    %v558 = vpop.f32.mrb[0].mxu0
    %v559 = vadd.f32 %v96, %v558
    %560 = vmatprep.mubr.f32.mxu0 0.0
    %561 = vmatmul.mubr.f32.gmra.mrb[0].mxu0 %v203
    %v562 = vpop.f32.mrb[0].mxu0
    %v563 = vadd.f32 %v92, %v562
    %v564 = vpop.f32.mrb[0].mxu0
    %v565 = vadd.f32 %v96, %v564
    %566 = vmatprep.mubr.f32.mxu0 0.0
    %567 = vmatmul.mubr.f32.gmra.mrb[0].mxu0 %v206
    %v568 = vpop.f32.mrb[0].mxu0
    %v569 = vadd.f32 %v92, %v568
    %v570 = vpop.f32.mrb[0].mxu0
    %v571 = vadd.f32 %v96, %v570
    %572 = vmatprep.mubr.f32.mxu0 0.0
    %573 = vmatmul.mubr.f32.gmra.mrb[0].mxu0 %v209
    %v574 = vpop.f32.mrb[0].mxu0
    %v575 = vadd.f32 %v92, %v574
    %v576 = vpop.f32.mrb[0].mxu0
    %v577 = vadd.f32 %v96, %v576
    %578 = vmatprep.mubr.f32.mxu0 0.0
    %579 = vmatmul.mubr.f32.gmra.mrb[0].mxu0 %v212
    %v580 = vpop.f32.mrb[0].mxu0
    %v581 = vadd.f32 %v92, %v580
    %v582 = vpop.f32.mrb[0].mxu0
    %v583 = vadd.f32 %v96, %v582
    %584 = vmatprep.mubr.f32.mxu0 0.0
    %585 = vmatmul.mubr.f32.gmra.mrb[0].mxu0 %v215
    %v586 = vpop.f32.mrb[0].mxu0
    %v587 = vadd.f32 %v92, %v586
    %v588 = vpop.f32.mrb[0].mxu0
    %v589 = vadd.f32 %v96, %v588
    %590 = vmatprep.mubr.f32.mxu0 0.0
    %591 = vmatmul.mubr.f32.gmra.mrb[0].mxu0 %v218
    %v592 = vpop.f32.mrb[0].mxu0
    %v593 = vadd.f32 %v92, %v592
    %v594 = vpop.f32.mrb[0].mxu0
    %v595 = vadd.f32 %v96, %v594
    %596 = vmatprep.mubr.f32.mxu0 0.0
    %597 = vmatmul.mubr.f32.gmra.mrb[0].mxu0 %v221
    %v598 = vpop.f32.mrb[0].mxu0
    %v599 = vadd.f32 %v92, %v598
    %v600 = vpop.f32.mrb[0].mxu0
    %v601 = vadd.f32 %v96, %v600
    %602 = vmatprep.mubr.f32.mxu0 0.0
    %603 = vmatmul.mubr.f32.gmra.mrb[0].mxu0 %v224
    %v604 = vpop.f32.mrb[0].mxu0
    %v605 = vadd.f32 %v92, %v604
    %v606 = vpop.f32.mrb[0].mxu0
    %v607 = vadd.f32 %v96, %v606
    %608 = vmatprep.mubr.f32.mxu0 0.0
    %609 = vmatmul.mubr.f32.gmra.mrb[0].mxu0 %v227
    %v610 = vpop.f32.mrb[0].mxu0
    %v611 = vadd.f32 %v92, %v610
    %v612 = vpop.f32.mrb[0].mxu0
    %v613 = vadd.f32 %v96, %v612
    %614 = vmatprep.mubr.f32.mxu0 0.0
    %615 = vmatmul.mubr.f32.gmra.mrb[0].mxu0 %v230
    %v616 = vpop.f32.mrb[0].mxu0
    %v617 = vadd.f32 %v92, %v616
    %v618 = vpop.f32.mrb[0].mxu0
    %v619 = vadd.f32 %v96, %v618
    %620 = vmatprep.mubr.f32.mxu0 0.0
    %621 = vmatmul.mubr.f32.gmra.mrb[0].mxu0 %v233
    %v622 = vpop.f32.mrb[0].mxu0
    %v623 = vadd.f32 %v92, %v622
    %v624 = vpop.f32.mrb[0].mxu0
    %v625 = vadd.f32 %v96, %v624
    %626 = vmatprep.mubr.f32.mxu0 0.0
    %627 = vmatmul.mubr.f32.gmra.mrb[0].mxu0 %v236
    %v628 = vpop.f32.mrb[0].mxu0
    %v629 = vadd.f32 %v92, %v628
    %v630 = vpop.f32.mrb[0].mxu0
    %v631 = vadd.f32 %v96, %v630
    %632 = vmatprep.mubr.f32.mxu0 0.0
    %633 = vmatmul.mubr.f32.gmra.mrb[0].mxu0 %v239
    %v634 = vpop.f32.mrb[0].mxu0
    %v635 = vadd.f32 %v92, %v634
    %v636 = vpop.f32.mrb[0].mxu0
    %v637 = vadd.f32 %v96, %v636
    %638 = vmatprep.mubr.f32.mxu0 0.0
    %639 = vmatmul.mubr.f32.gmra.mrb[0].mxu0 %v242
    %v640 = vpop.f32.mrb[0].mxu0
    %v641 = vadd.f32 %v92, %v640
    %v642 = vpop.f32.mrb[0].mxu0
    %v643 = vadd.f32 %v96, %v642
    %644 = vmatprep.mubr.f32.mxu0 0.0
    %645 = vmatmul.mubr.f32.gmra.mrb[0].mxu0 %v245
    %v646 = vpop.f32.mrb[0].mxu0
    %v647 = vadd.f32 %v92, %v646
    %v648 = vpop.f32.mrb[0].mxu0
    %v649 = vadd.f32 %v96, %v648
    %650 = vmatprep.mubr.f32.mxu0 0.0
    %651 = vmatmul.mubr.f32.gmra.mrb[0].mxu0 %v248
    %v652 = vpop.f32.mrb[0].mxu0
    %v653 = vadd.f32 %v92, %v652
    %v654 = vpop.f32.mrb[0].mxu0
    %v655 = vadd.f32 %v96, %v654
    %656 = vmatprep.mubr.f32.mxu0 0.0
    %657 = vmatmul.mubr.f32.gmra.mrb[0].mxu0 %v251
    %v658 = vpop.f32.mrb[0].mxu0
    %v659 = vadd.f32 %v92, %v658
    %v660 = vpop.f32.mrb[0].mxu0
    %v661 = vadd.f32 %v96, %v660
    %662 = vmatprep.mubr.f32.mxu0 0.0
    %663 = vmatmul.mubr.f32.gmra.mrb[0].mxu0 %v254
    %v664 = vpop.f32.mrb[0].mxu0
    %v665 = vadd.f32 %v92, %v664
    %v666 = vpop.f32.mrb[0].mxu0
    %v667 = vadd.f32 %v96, %v666
    %668 = vmatprep.mubr.f32.mxu0 0.0
    %669 = vmatmul.mubr.f32.gmra.mrb[0].mxu0 %v257
    %v670 = vpop.f32.mrb[0].mxu0
    %v671 = vadd.f32 %v92, %v670
    %v672 = vpop.f32.mrb[0].mxu0
    %v673 = vadd.f32 %v96, %v672
    %674 = vmatprep.mubr.f32.mxu0 0.0
    %675 = vmatmul.mubr.f32.gmra.mrb[0].mxu0 %v260
    %v676 = vpop.f32.mrb[0].mxu0
    %v677 = vadd.f32 %v92, %v676
    %v678 = vpop.f32.mrb[0].mxu0
    %v679 = vadd.f32 %v96, %v678
    %680 = vmatprep.mubr.f32.mxu0 0.0
    %681 = vmatmul.mubr.f32.gmra.mrb[0].mxu0 %v263
    %v682 = vpop.f32.mrb[0].mxu0
    %v683 = vadd.f32 %v92, %v682
    %v684 = vpop.f32.mrb[0].mxu0
    %v685 = vadd.f32 %v96, %v684
    %686 = vmatprep.mubr.f32.mxu0 0.0
    %687 = vmatmul.mubr.f32.gmra.mrb[0].mxu0 %v266
    %v688 = vpop.f32.mrb[0].mxu0
    %v689 = vadd.f32 %v92, %v688
    %v690 = vpop.f32.mrb[0].mxu0
    %v691 = vadd.f32 %v96, %v690
    %692 = vmatprep.mubr.f32.mxu0 0.0
    %693 = vmatmul.mubr.f32.gmra.mrb[0].mxu0 %v269
    %v694 = vpop.f32.mrb[0].mxu0
    %v695 = vadd.f32 %v92, %v694
    %v696 = vpop.f32.mrb[0].mxu0
    %v697 = vadd.f32 %v96, %v696
    %698 = vmatprep.mubr.f32.mxu0 0.0
    %699 = vmatmul.mubr.f32.gmra.mrb[0].mxu0 %v272
    %v700 = vpop.f32.mrb[0].mxu0
    %v701 = vadd.f32 %v92, %v700
    %v702 = vpop.f32.mrb[0].mxu0
    %v703 = vadd.f32 %v96, %v702
    %704 = vmatprep.mubr.f32.mxu0 0.0
    %705 = vmatmul.mubr.f32.gmra.mrb[0].mxu0 %v275
    %v706 = vpop.f32.mrb[0].mxu0
    %v707 = vadd.f32 %v92, %v706
    %v708 = vpop.f32.mrb[0].mxu0
    %v709 = vadd.f32 %v96, %v708
    %710 = vmatprep.mubr.f32.mxu0 0.0
    %711 = vmatmul.mubr.f32.gmra.mrb[0].mxu0 %v278
    %v712 = vpop.f32.mrb[0].mxu0
    %v713 = vadd.f32 %v92, %v712
    %v714 = vpop.f32.mrb[0].mxu0
    %v715 = vadd.f32 %v96, %v714
    %716 = vmatprep.mubr.f32.mxu0 0.0
    %717 = vmatmul.mubr.f32.gmra.mrb[0].mxu0 %v281
    %v718 = vpop.f32.mrb[0].mxu0
    %v719 = vadd.f32 %v92, %v718
    %v720 = vpop.f32.mrb[0].mxu0
    %v721 = vadd.f32 %v96, %v720
    %722 = vmatprep.mubr.f32.mxu0 0.0
    %723 = vmatmul.mubr.f32.gmra.mrb[0].mxu0 %v284
    %v724 = vpop.f32.mrb[0].mxu0
    %v725 = vadd.f32 %v92, %v724
    %v726 = vpop.f32.mrb[0].mxu0
    %v727 = vadd.f32 %v96, %v726
    %728 = vmatprep.mubr.f32.mxu0 0.0
    %729 = vmatmul.mubr.f32.gmra.mrb[0].mxu0 %v287
    %v730 = vpop.f32.mrb[0].mxu0
    %v731 = vadd.f32 %v92, %v730
    %v732 = vpop.f32.mrb[0].mxu0
    %v733 = vadd.f32 %v96, %v732
    %734 = vmatprep.mubr.f32.mxu0 0.0
    %735 = vmatmul.mubr.f32.gmra.mrb[0].mxu0 %v290
    %v736 = vpop.f32.mrb[0].mxu0
    %v737 = vadd.f32 %v92, %v736
    %v738 = vpop.f32.mrb[0].mxu0
    %v739 = vadd.f32 %v96, %v738
    %740 = vdwg.mxu0
    %v741 = vmax.f32 %v359, 0.0
    %v742 = vmax.f32 %v361, 0.0
    %v743 = vmax.f32 %v365, 0.0
    %v744 = vmax.f32 %v367, 0.0
    %v745 = vmax.f32 %v371, 0.0
    %v746 = vmax.f32 %v373, 0.0
    %v747 = vmax.f32 %v377, 0.0
    %v748 = vmax.f32 %v379, 0.0
    %v749 = vmax.f32 %v383, 0.0
    %v750 = vmax.f32 %v385, 0.0
    %v751 = vmax.f32 %v389, 0.0
    %v752 = vmax.f32 %v391, 0.0
    %v753 = vmax.f32 %v395, 0.0
    %v754 = vmax.f32 %v397, 0.0
    %v755 = vmax.f32 %v401, 0.0
    %v756 = vmax.f32 %v403, 0.0
    %v757 = vmax.f32 %v407, 0.0
    %v758 = vmax.f32 %v409, 0.0
    %v759 = vmax.f32 %v413, 0.0
    %v760 = vmax.f32 %v415, 0.0
    %v761 = vmax.f32 %v419, 0.0
    %v762 = vmax.f32 %v421, 0.0
    %v763 = vmax.f32 %v425, 0.0
    %v764 = vmax.f32 %v427, 0.0
    %v765 = vmax.f32 %v431, 0.0
    %v766 = vmax.f32 %v433, 0.0
    %v767 = vmax.f32 %v437, 0.0
    %v768 = vmax.f32 %v439, 0.0
    %v769 = vmax.f32 %v443, 0.0
    %v770 = vmax.f32 %v445, 0.0
    %v771 = vmax.f32 %v449, 0.0
    %v772 = vmax.f32 %v451, 0.0
    %v773 = vmax.f32 %v455, 0.0
    %v774 = vmax.f32 %v457, 0.0
    %v775 = vmax.f32 %v461, 0.0
    %v776 = vmax.f32 %v463, 0.0
    %v777 = vmax.f32 %v467, 0.0
    %v778 = vmax.f32 %v469, 0.0
    %v779 = vmax.f32 %v473, 0.0
    %v780 = vmax.f32 %v475, 0.0
    %v781 = vmax.f32 %v479, 0.0
    %v782 = vmax.f32 %v481, 0.0
    %v783 = vmax.f32 %v485, 0.0
    %v784 = vmax.f32 %v487, 0.0
    %v785 = vmax.f32 %v491, 0.0
    %v786 = vmax.f32 %v493, 0.0
    %v787 = vmax.f32 %v497, 0.0
    %v788 = vmax.f32 %v499, 0.0
    %v789 = vmax.f32 %v503, 0.0
    %v790 = vmax.f32 %v505, 0.0
    %v791 = vmax.f32 %v509, 0.0
    %v792 = vmax.f32 %v511, 0.0
    %v793 = vmax.f32 %v515, 0.0
    %v794 = vmax.f32 %v517, 0.0
    %v795 = vmax.f32 %v521, 0.0
    %v796 = vmax.f32 %v523, 0.0
    %v797 = vmax.f32 %v527, 0.0
    %v798 = vmax.f32 %v529, 0.0
    %v799 = vmax.f32 %v533, 0.0
    %v800 = vmax.f32 %v535, 0.0
    %v801 = vmax.f32 %v539, 0.0
    %v802 = vmax.f32 %v541, 0.0
    %v803 = vmax.f32 %v545, 0.0
    %v804 = vmax.f32 %v547, 0.0
    %v805 = vmax.f32 %v551, 0.0
    %v806 = vmax.f32 %v553, 0.0
    %v807 = vmax.f32 %v557, 0.0
    %v808 = vmax.f32 %v559, 0.0
    %v809 = vmax.f32 %v563, 0.0
    %v810 = vmax.f32 %v565, 0.0
    %v811 = vmax.f32 %v569, 0.0
    %v812 = vmax.f32 %v571, 0.0
    %v813 = vmax.f32 %v575, 0.0
    %v814 = vmax.f32 %v577, 0.0
    %v815 = vmax.f32 %v581, 0.0
    %v816 = vmax.f32 %v583, 0.0
    %v817 = vmax.f32 %v587, 0.0
    %v818 = vmax.f32 %v589, 0.0
    %v819 = vmax.f32 %v593, 0.0
    %v820 = vmax.f32 %v595, 0.0
    %v821 = vmax.f32 %v599, 0.0
    %v822 = vmax.f32 %v601, 0.0
    %v823 = vmax.f32 %v605, 0.0
    %v824 = vmax.f32 %v607, 0.0
    %v825 = vmax.f32 %v611, 0.0
    %v826 = vmax.f32 %v613, 0.0
    %v827 = vmax.f32 %v617, 0.0
    %v828 = vmax.f32 %v619, 0.0
    %v829 = vmax.f32 %v623, 0.0
    %v830 = vmax.f32 %v625, 0.0
    %v831 = vmax.f32 %v629, 0.0
    %v832 = vmax.f32 %v631, 0.0
    %v833 = vmax.f32 %v635, 0.0
    %v834 = vmax.f32 %v637, 0.0
    %v835 = vmax.f32 %v641, 0.0
    %v836 = vmax.f32 %v643, 0.0
    %v837 = vmax.f32 %v647, 0.0
    %v838 = vmax.f32 %v649, 0.0
    %v839 = vmax.f32 %v653, 0.0
    %v840 = vmax.f32 %v655, 0.0
    %v841 = vmax.f32 %v659, 0.0
    %v842 = vmax.f32 %v661, 0.0
    %v843 = vmax.f32 %v665, 0.0
    %v844 = vmax.f32 %v667, 0.0
    %v845 = vmax.f32 %v671, 0.0
    %v846 = vmax.f32 %v673, 0.0
    %v847 = vmax.f32 %v677, 0.0
    %v848 = vmax.f32 %v679, 0.0
    %v849 = vmax.f32 %v683, 0.0
    %v850 = vmax.f32 %v685, 0.0
    %v851 = vmax.f32 %v689, 0.0
    %v852 = vmax.f32 %v691, 0.0
    %v853 = vmax.f32 %v695, 0.0
    %v854 = vmax.f32 %v697, 0.0
    %v855 = vmax.f32 %v701, 0.0
    %v856 = vmax.f32 %v703, 0.0
    %v857 = vmax.f32 %v707, 0.0
    %v858 = vmax.f32 %v709, 0.0
    %v859 = vmax.f32 %v713, 0.0
    %v860 = vmax.f32 %v715, 0.0
    %v861 = vmax.f32 %v719, 0.0
    %v862 = vmax.f32 %v721, 0.0
    %v863 = vmax.f32 %v725, 0.0
    %v864 = vmax.f32 %v727, 0.0
    %v865 = vmax.f32 %v731, 0.0
    %v866 = vmax.f32 %v733, 0.0
    %v867 = vmax.f32 %v737, 0.0
    %v868 = vmax.f32 %v739, 0.0
    %869 = vst [vmem:[#allocation2] sm:$0xff] %v741
    %870 = vst [vmem:[#allocation2 + $0x8] sm:$0xff] %v742
    %871 = vst [vmem:[#allocation2 + $0x10] sm:$0xff] %v743
    %872 = vst [vmem:[#allocation2 + $0x18] sm:$0xff] %v744
    %873 = vst [vmem:[#allocation2 + $0x20] sm:$0xff] %v745
    %874 = vst [vmem:[#allocation2 + $0x28] sm:$0xff] %v746
    %875 = vst [vmem:[#allocation2 + $0x30] sm:$0xff] %v747
    %876 = vst [vmem:[#allocation2 + $0x38] sm:$0xff] %v748
    %877 = vst [vmem:[#allocation2 + $0x40] sm:$0xff] %v749
    %878 = vst [vmem:[#allocation2 + $0x48] sm:$0xff] %v750
    %879 = vst [vmem:[#allocation2 + $0x50] sm:$0xff] %v751
    %880 = vst [vmem:[#allocation2 + $0x58] sm:$0xff] %v752
    %881 = vst [vmem:[#allocation2 + $0x60] sm:$0xff] %v753
    %882 = vst [vmem:[#allocation2 + $0x68] sm:$0xff] %v754
    %883 = vst [vmem:[#allocation2 + $0x70] sm:$0xff] %v755
    %884 = vst [vmem:[#allocation2 + $0x78] sm:$0xff] %v756
    %885 = vst [vmem:[#allocation2 + $0x80] sm:$0xff] %v757
    %886 = vst [vmem:[#allocation2 + $0x88] sm:$0xff] %v758
    %887 = vst [vmem:[#allocation2 + $0x90] sm:$0xff] %v759
    %888 = vst [vmem:[#allocation2 + $0x98] sm:$0xff] %v760
    %889 = vst [vmem:[#allocation2 + $0xa0] sm:$0xff] %v761
    %890 = vst [vmem:[#allocation2 + $0xa8] sm:$0xff] %v762
    %891 = vst [vmem:[#allocation2 + $0xb0] sm:$0xff] %v763
    %892 = vst [vmem:[#allocation2 + $0xb8] sm:$0xff] %v764
    %893 = vst [vmem:[#allocation2 + $0xc0] sm:$0xff] %v765
    %894 = vst [vmem:[#allocation2 + $0xc8] sm:$0xff] %v766
    %895 = vst [vmem:[#allocation2 + $0xd0] sm:$0xff] %v767
    %896 = vst [vmem:[#allocation2 + $0xd8] sm:$0xff] %v768
    %897 = vst [vmem:[#allocation2 + $0xe0] sm:$0xff] %v769
    %898 = vst [vmem:[#allocation2 + $0xe8] sm:$0xff] %v770
    %899 = vst [vmem:[#allocation2 + $0xf0] sm:$0xff] %v771
    %900 = vst [vmem:[#allocation2 + $0xf8] sm:$0xff] %v772
    %901 = vst [vmem:[#allocation2 + $0x100] sm:$0xff] %v773
    %902 = vst [vmem:[#allocation2 + $0x108] sm:$0xff] %v774
    %903 = vst [vmem:[#allocation2 + $0x110] sm:$0xff] %v775
    %904 = vst [vmem:[#allocation2 + $0x118] sm:$0xff] %v776
    %905 = vst [vmem:[#allocation2 + $0x120] sm:$0xff] %v777
    %906 = vst [vmem:[#allocation2 + $0x128] sm:$0xff] %v778
    %907 = vst [vmem:[#allocation2 + $0x130] sm:$0xff] %v779
    %908 = vst [vmem:[#allocation2 + $0x138] sm:$0xff] %v780
    %909 = vst [vmem:[#allocation2 + $0x140] sm:$0xff] %v781
    %910 = vst [vmem:[#allocation2 + $0x148] sm:$0xff] %v782
    %911 = vst [vmem:[#allocation2 + $0x150] sm:$0xff] %v783
    %912 = vst [vmem:[#allocation2 + $0x158] sm:$0xff] %v784
    %913 = vst [vmem:[#allocation2 + $0x160] sm:$0xff] %v785
    %914 = vst [vmem:[#allocation2 + $0x168] sm:$0xff] %v786
    %915 = vst [vmem:[#allocation2 + $0x170] sm:$0xff] %v787
    %916 = vst [vmem:[#allocation2 + $0x178] sm:$0xff] %v788
    %917 = vst [vmem:[#allocation2 + $0x180] sm:$0xff] %v789
    %918 = vst [vmem:[#allocation2 + $0x188] sm:$0xff] %v790
    %919 = vst [vmem:[#allocation2 + $0x190] sm:$0xff] %v791
    %920 = vst [vmem:[#allocation2 + $0x198] sm:$0xff] %v792
    %921 = vst [vmem:[#allocation2 + $0x1a0] sm:$0xff] %v793
    %922 = vst [vmem:[#allocation2 + $0x1a8] sm:$0xff] %v794
    %923 = vst [vmem:[#allocation2 + $0x1b0] sm:$0xff] %v795
    %924 = vst [vmem:[#allocation2 + $0x1b8] sm:$0xff] %v796
    %925 = vst [vmem:[#allocation2 + $0x1c0] sm:$0xff] %v797
    %926 = vst [vmem:[#allocation2 + $0x1c8] sm:$0xff] %v798
    %927 = vst [vmem:[#allocation2 + $0x1d0] sm:$0xff] %v799
    %928 = vst [vmem:[#allocation2 + $0x1d8] sm:$0xff] %v800
    %929 = vst [vmem:[#allocation2 + $0x1e0] sm:$0xff] %v801
    %930 = vst [vmem:[#allocation2 + $0x1e8] sm:$0xff] %v802
    %931 = vst [vmem:[#allocation2 + $0x1f0] sm:$0xff] %v803
    %932 = vst [vmem:[#allocation2 + $0x1f8] sm:$0xff] %v804
    %933 = vst [vmem:[#allocation2 + $0x200] sm:$0xff] %v805
    %934 = vst [vmem:[#allocation2 + $0x208] sm:$0xff] %v806
    %935 = vst [vmem:[#allocation2 + $0x210] sm:$0xff] %v807
    %936 = vst [vmem:[#allocation2 + $0x218] sm:$0xff] %v808
    %937 = vst [vmem:[#allocation2 + $0x220] sm:$0xff] %v809
    %938 = vst [vmem:[#allocation2 + $0x228] sm:$0xff] %v810
    %939 = vst [vmem:[#allocation2 + $0x230] sm:$0xff] %v811
    %940 = vst [vmem:[#allocation2 + $0x238] sm:$0xff] %v812
    %941 = vst [vmem:[#allocation2 + $0x240] sm:$0xff] %v813
    %942 = vst [vmem:[#allocation2 + $0x248] sm:$0xff] %v814
    %943 = vst [vmem:[#allocation2 + $0x250] sm:$0xff] %v815
    %944 = vst [vmem:[#allocation2 + $0x258] sm:$0xff] %v816
    %945 = vst [vmem:[#allocation2 + $0x260] sm:$0xff] %v817
    %946 = vst [vmem:[#allocation2 + $0x268] sm:$0xff] %v818
    %947 = vst [vmem:[#allocation2 + $0x270] sm:$0xff] %v819
    %948 = vst [vmem:[#allocation2 + $0x278] sm:$0xff] %v820
    %949 = vst [vmem:[#allocation2 + $0x280] sm:$0xff] %v821
    %950 = vst [vmem:[#allocation2 + $0x288] sm:$0xff] %v822
    %951 = vst [vmem:[#allocation2 + $0x290] sm:$0xff] %v823
    %952 = vst [vmem:[#allocation2 + $0x298] sm:$0xff] %v824
    %953 = vst [vmem:[#allocation2 + $0x2a0] sm:$0xff] %v825
    %954 = vst [vmem:[#allocation2 + $0x2a8] sm:$0xff] %v826
    %955 = vst [vmem:[#allocation2 + $0x2b0] sm:$0xff] %v827
    %956 = vst [vmem:[#allocation2 + $0x2b8] sm:$0xff] %v828
    %957 = vst [vmem:[#allocation2 + $0x2c0] sm:$0xff] %v829
    %958 = vst [vmem:[#allocation2 + $0x2c8] sm:$0xff] %v830
    %959 = vst [vmem:[#allocation2 + $0x2d0] sm:$0xff] %v831
    %960 = vst [vmem:[#allocation2 + $0x2d8] sm:$0xff] %v832
    %961 = vst [vmem:[#allocation2 + $0x2e0] sm:$0xff] %v833
    %962 = vst [vmem:[#allocation2 + $0x2e8] sm:$0xff] %v834
    %963 = vst [vmem:[#allocation2 + $0x2f0] sm:$0xff] %v835
    %964 = vst [vmem:[#allocation2 + $0x2f8] sm:$0xff] %v836
    %965 = vst [vmem:[#allocation2 + $0x300] sm:$0xff] %v837
    %966 = vst [vmem:[#allocation2 + $0x308] sm:$0xff] %v838
    %967 = vst [vmem:[#allocation2 + $0x310] sm:$0xff] %v839
    %968 = vst [vmem:[#allocation2 + $0x318] sm:$0xff] %v840
    %969 = vst [vmem:[#allocation2 + $0x320] sm:$0xff] %v841
    %970 = vst [vmem:[#allocation2 + $0x328] sm:$0xff] %v842
    %971 = vst [vmem:[#allocation2 + $0x330] sm:$0xff] %v843
    %972 = vst [vmem:[#allocation2 + $0x338] sm:$0xff] %v844
    %973 = vst [vmem:[#allocation2 + $0x340] sm:$0xff] %v845
    %974 = vst [vmem:[#allocation2 + $0x348] sm:$0xff] %v846
    %975 = vst [vmem:[#allocation2 + $0x350] sm:$0xff] %v847
    %976 = vst [vmem:[#allocation2 + $0x358] sm:$0xff] %v848
    %977 = vst [vmem:[#allocation2 + $0x360] sm:$0xff] %v849
    %978 = vst [vmem:[#allocation2 + $0x368] sm:$0xff] %v850
    %979 = vst [vmem:[#allocation2 + $0x370] sm:$0xff] %v851
    %980 = vst [vmem:[#allocation2 + $0x378] sm:$0xff] %v852
    %981 = vst [vmem:[#allocation2 + $0x380] sm:$0xff] %v853
    %982 = vst [vmem:[#allocation2 + $0x388] sm:$0xff] %v854
    %983 = vst [vmem:[#allocation2 + $0x390] sm:$0xff] %v855
    %984 = vst [vmem:[#allocation2 + $0x398] sm:$0xff] %v856
    %985 = vst [vmem:[#allocation2 + $0x3a0] sm:$0xff] %v857
    %986 = vst [vmem:[#allocation2 + $0x3a8] sm:$0xff] %v858
    %987 = vst [vmem:[#allocation2 + $0x3b0] sm:$0xff] %v859
    %988 = vst [vmem:[#allocation2 + $0x3b8] sm:$0xff] %v860
    %989 = vst [vmem:[#allocation2 + $0x3c0] sm:$0xff] %v861
    %990 = vst [vmem:[#allocation2 + $0x3c8] sm:$0xff] %v862
    %991 = vst [vmem:[#allocation2 + $0x3d0] sm:$0xff] %v863
    %992 = vst [vmem:[#allocation2 + $0x3d8] sm:$0xff] %v864
    %993 = vst [vmem:[#allocation2 + $0x3e0] sm:$0xff] %v865
    %994 = vst [vmem:[#allocation2 + $0x3e8] sm:$0xff] %v866
    %995 = vst [vmem:[#allocation2 + $0x3f0] sm:$0xff] %v867
    %996 = vst [vmem:[#allocation2 + $0x3f8] sm:$0xff] %v868
    // Predicated region
    $region14: #{tpu_custom_call.1} parent=1 // pred_check
      _
    $region15: #{tpu_custom_call.1} parent=1 // pred_check_branch
      %998 = sbr.rel (0) target = $region17
    $region16: #{tpu_custom_call.1} parent=1 // pred_region
      %s1000 = ssub.s32 16384, 16384
      %1001 = vsyncadd [#allocation3], %s1000
      %s1002 = sshll.u32 [#allocation2], 4
      %s1003 = int_to_ptr.vmem [resolvable:$true] %s1002
      %1008 = dma.vmem_to_hbm [thread:$0]  %s1003, 16384, %s3, [#allocation3], 256, 256, 16
    $region17: #{tpu_custom_call.1} parent=1 // pred_fallthru
      _
    // Predicated region
    $region18: #{tpu_custom_call.1} parent=1 // pred_check
      _
    $region19: #{tpu_custom_call.1} parent=1 // pred_check_branch
      %1010 = sbr.rel (0) target = $region21
    $region20: #{tpu_custom_call.1} parent=1 // pred_region
      %1011 = dma.done [#allocation3], 16384
    $region21: #{tpu_custom_call.1} parent=1 // pred_fallthru
      _
    %1012 = vsyncpa [#allocation3], 1

</llo_original>
